<compile_context>
chip_gen: v5e
topology: v5e:2x2
jax: 0.10.0
libtpu: 0.0.40
codegen_flags: <defaults>
</compile_context>

<pallas_src>
import functools

import jax
import jax.numpy as jnp
from jax.experimental import pallas as pl
from jax.experimental.pallas import tpu as pltpu

EPS = 1e-12  # matches torch.nn.functional.normalize default eps


def _netvlad_kernel(x_ref, c_ref, b_ref, out_ref, *, beta, approx):
    # x_ref:  (nb, D, S)  block of samples (D channels, S = H*W positions),
    #                     f32 or bf16 transport dtype
    # c_ref:  (K, D)      centroids (f32)
    # b_ref:  (1, K, 1)   conv bias  (= -beta * ||c_k||, f32)
    # out_ref:(nb, K, D)  f32 output block
    nb, d, s = x_ref.shape
    k = c_ref.shape[0]

    x = x_ref[...]                                   # compact dtype, MXU operand
    c = c_ref[...]                                   # (K, D) f32
    bias = b_ref[...]                                # (1, K, 1) f32

    # conv weight = 2*beta*centroids; beta is a static hyper-parameter so the
    # rescale is one tiny VPU pass over (K, D) and the centroids are shipped /
    # resident in VMEM only once.
    w = (2.0 * beta * c).astype(x.dtype)             # (K, D)

    # 1x1 conv over channels == batched matmul:
    #   logits[n,k,s] = sum_d w[k,d] * x[n,d,s] + bias[k]
    # Leading-batch dot_general (the well-supported Mosaic form).  The nb-way
    # weight broadcast costs nb*K*D*itemsize of VMEM (counted in the block-size
    # budget); the kernel is HBM-bound, so the extra MXU weight pushes are
    # hidden under the x DMA.
    w_b = jnp.broadcast_to(w[None], (nb, k, d))
    logits = jax.lax.dot_general(
        w_b, x,
        dimension_numbers=(((2,), (1,)), ((0,), (0,))),
        preferred_element_type=jnp.float32) + bias               # (nb, K, S) f32

    # softmax over the cluster axis (axis 1, non-minor -> pure VPU reduction)
    m = jnp.max(logits, axis=1, keepdims=True)
    e = jnp.exp(logits - m)
    a = e * pl.reciprocal(jnp.sum(e, axis=1, keepdims=True), approx=approx)

    # vlad[n,k,d] = sum_s a[n,k,s]*x[n,d,s] - c[k,d]*sum_s a[n,k,s]
    a_sum = jnp.sum(a, axis=2, keepdims=True)                    # (nb, K, 1)
    vlad = jax.lax.dot_general(
        a.astype(x.dtype), x,
        dimension_numbers=(((2,), (2,)), ((0,), (0,))),          # shared last (lane) dim
        preferred_element_type=jnp.float32)                      # (nb, K, D) f32
    vlad = vlad - c[None, :, :] * a_sum

    # intra (per-cluster) + global L2 normalization fused into a single scale;
    # rsqrt keeps the divides on the otherwise-idle EUP.  The global norm is
    # computed from the per-cluster squared norms (no second pass over (K, D)).
    ss = jnp.sum(vlad * vlad, axis=2, keepdims=True)             # (nb, K, 1)
    inv_d = jax.lax.rsqrt(jnp.maximum(ss, EPS * EPS))            # 1/max(||v_k||, eps)
    g_sq = jnp.sum(ss * (inv_d * inv_d), axis=1, keepdims=True)  # (nb, 1, 1)
    inv_g = jax.lax.rsqrt(jnp.maximum(g_sq, EPS * EPS))          # 1/max(||vhat||, eps)
    out_ref[...] = (vlad * (inv_d * inv_g)).astype(out_ref.dtype)


def _vmem_capacity_bytes():
    """Physical VMEM of the local TPU generation (fallback: v7x-sized 64 MiB)."""
    try:
        info = pltpu.get_tpu_info()
        cap = getattr(info, "vmem_capacity_bytes", None)
        if cap:
            return int(cap)
    except Exception:
        pass
    return 64 << 20


def _choose_block_n(N, D, S, K, x_itemsize, vmem_cap):
    """Samples per grid step.

    Aims: (a) keep the double-buffered IO blocks plus the main in-kernel
    temporaries at ~40% of physical VMEM (generation-aware), (b) pick a divisor
    of N so the wrapper never pads/copies x, (c) prefer an even number of grid
    steps so v7x's two TensorCores split the 'parallel' grid evenly (harmless
    on 1-TC v5e/v6e: one extra ~0.35us step)."""
    per_sample = (2 * D * S * x_itemsize      # x block (double-buffered)
                  + 2 * K * D * 4             # out block (double-buffered, f32)
                  + 3 * K * S * 4             # logits / exp / soft-assign (f32)
                  + K * S * x_itemsize        # soft-assign cast for 2nd matmul
                  + K * D * x_itemsize        # broadcast conv weights
                  + K * D * 4)                # vlad accumulator
    budget = max(4 << 20, int(0.40 * vmem_cap))
    cap = max(1, budget // per_sample)

    divisors = [d for d in range(N, 0, -1) if N % d == 0]
    for require_even_steps in (True, False):
        for nb in divisors:
            if require_even_steps and (N // nb) % 2 != 0:
                continue
            if nb <= cap:
                return nb
    return 1  # unreachable (nb = 1 always satisfies), kept for safety


def netvlad_forward(x_nchw, centroids, beta, *, block_n=None,
                    x_compute_dtype=jnp.bfloat16):
    """x_nchw: (N, D, H, W). centroids: (K, D). Returns (N, K*D) float32."""
    N, D, H, W = x_nchw.shape
    K = centroids.shape[0]
    S = H * W

    # Ship x compactly (bf16 halves the dominant HBM read stream); use
    # x_compute_dtype=jnp.float32 for an exact match with the reference.
    x_flat = x_nchw.reshape(N, D, S).astype(x_compute_dtype)
    x_itemsize = jnp.dtype(x_compute_dtype).itemsize

    c32 = centroids.astype(jnp.float32)
    bias = (-float(beta) * jnp.linalg.norm(c32, axis=1)).reshape(1, K, 1)

    vmem_cap = _vmem_capacity_bytes()
    nb = int(block_n) if block_n is not None else _choose_block_n(
        N, D, S, K, x_itemsize, vmem_cap)

    n_pad = pl.cdiv(N, nb) * nb
    if n_pad != N:
        # Fallback only (user-forced block_n): _choose_block_n always picks a
        # divisor of N, so this x copy is normally skipped.
        x_flat = jnp.pad(x_flat, ((0, n_pad - N), (0, 0), (0, 0)))
    grid = (n_pad // nb,)

    # Explicit, generation-aware VMEM budget: double-buffered x/out blocks,
    # resident params and the main in-kernel temporaries.
    x_block = nb * D * S * x_itemsize
    out_block = nb * K * D * 4
    temps = nb * (3 * K * S * 4 + K * S * x_itemsize
                  + K * D * x_itemsize + K * D * 4)
    params = 2 * (K * D + K) * 4
    need = 2 * (x_block + out_block) + temps + params
    vmem_limit = int(max(need + (4 << 20), 16 << 20))
    vmem_limit = int(min(vmem_limit, max(vmem_cap - (8 << 20), 16 << 20)))

    kernel = functools.partial(
        _netvlad_kernel,
        beta=float(beta),
        approx=(x_itemsize < 4))   # approx EUP recip only in the bf16 path

    out = pl.pallas_call(
        kernel,
        out_shape=jax.ShapeDtypeStruct((n_pad, K, D), jnp.float32),
        grid_spec=pltpu.PrefetchScalarGridSpec(
            num_scalar_prefetch=0,
            grid=grid,
            in_specs=[
                pl.BlockSpec((nb, D, S), lambda n: (n, 0, 0)),
                pl.BlockSpec((K, D), lambda n: (0, 0)),
                pl.BlockSpec((1, K, 1), lambda n: (0, 0, 0)),
            ],
            out_specs=pl.BlockSpec((nb, K, D), lambda n: (n, 0, 0)),
        ),
        compiler_params=pltpu.CompilerParams(
            dimension_semantics=("parallel",),
            vmem_limit_bytes=vmem_limit),
    )(x_flat, c32, bias)

    if n_pad != N:
        out = out[:N]
    return out.reshape(N, K * D)


def _netvlad_reference(x_nchw, centroids, beta):
    """Pure-JAX reference matching the PyTorch forward."""
    N, D, H, W = x_nchw.shape
    x_flat = x_nchw.reshape(N, D, -1)                                  # (N, D, S)
    bias = -beta * jnp.linalg.norm(centroids, axis=1)                  # (K,)
    logits = 2.0 * beta * jnp.einsum("kd,nds->nks", centroids, x_flat) + bias[None, :, None]
    a = jax.nn.softmax(logits, axis=1)                                 # (N, K, S)
    residual = x_flat[:, None, :, :] - centroids[None, :, :, None]     # (N, K, D, S)
    vlad = jnp.sum(residual * a[:, :, None, :], axis=-1)               # (N, K, D)
    vlad = vlad / jnp.maximum(jnp.linalg.norm(vlad, axis=2, keepdims=True), EPS)
    vlad = vlad.reshape(N, -1)
    vlad = vlad / jnp.maximum(jnp.linalg.norm(vlad, axis=1, keepdims=True), EPS)
    return vlad


if __name__ == "__main__":
    K, D, beta = 8, 128, 10.0
    N, H, W = 16, 8, 16          # S = H*W = 128 (lane-dense); 2 grid steps of 8

    key = jax.random.PRNGKey(0)
    k_c, k_x = jax.random.split(key)
    centroids = jax.random.uniform(k_c, (K, D), dtype=jnp.float32)   # ~ torch.rand(K, D)
    x = jax.random.normal(k_x, (N, D, H, W), dtype=jnp.float32)

    ref = _netvlad_reference(x, centroids, beta)

    # Exact-precision path (f32 transport): tight check against the reference.
    out_f32 = jax.block_until_ready(
        netvlad_forward(x, centroids, beta, x_compute_dtype=jnp.float32))
    assert out_f32.shape == (N, K * D)
    assert jnp.allclose(out_f32, ref, atol=2e-5, rtol=2e-5), "f32 kernel mismatch"

    # Bandwidth-optimized default path (bf16 x transport): looser check.
    out_bf16 = jax.block_until_ready(netvlad_forward(x, centroids, beta))
    err = jnp.abs(out_bf16 - ref)
    assert float(jnp.max(err)) < 4e-2, "bf16 kernel max-error too large"
    assert float(jnp.mean(err)) < 5e-3, "bf16 kernel mean-error too large"

    print("KERNEL_OK")
</pallas_src>

<mosaic_0001>
module attributes {stable_mosaic.version = 11 : i64} {
  func.func @_netvlad_kernel(%arg0: i32, %arg1: memref<8x128x128xf32, #tpu.memory_space<vmem>>, %arg2: memref<8x128xf32, #tpu.memory_space<vmem>>, %arg3: memref<1x8x1xf32, #tpu.memory_space<vmem>>, %arg4: memref<8x8x128xf32, #tpu.memory_space<vmem>>) attributes {dimension_semantics = [#tpu.dimension_semantics<parallel>], iteration_bounds = array<i64: 2>, scalar_prefetch = 0 : i64, scratch_operands = 0 : i64, tpu.core_type = #tpu.core_type<tc>, window_params = [{transform_indices = @transform_0, window_bounds = array<i64: 8, 128, 128>}, {pipeline_mode = #tpu.pipeline_mode<synchronous>, transform_indices = @transform_1, window_bounds = array<i64: 8, 128>}, {pipeline_mode = #tpu.pipeline_mode<synchronous>, transform_indices = @transform_2, window_bounds = array<i64: 1, 8, 1>}, {transform_indices = @transform_3, window_bounds = array<i64: 8, 8, 128>}]} {
    %c0 = arith.constant 0 : index
    %c0_0 = arith.constant 0 : index
    %c0_1 = arith.constant 0 : index
    %0 = vector.load %arg1[%c0, %c0_0, %c0_1] : memref<8x128x128xf32, #tpu.memory_space<vmem>>, vector<8x128x128xf32>
    %c0_2 = arith.constant 0 : index
    %c0_3 = arith.constant 0 : index
    %1 = vector.load %arg2[%c0_2, %c0_3] : memref<8x128xf32, #tpu.memory_space<vmem>>, vector<8x128xf32>
    %c0_4 = arith.constant 0 : index
    %c0_5 = arith.constant 0 : index
    %c0_6 = arith.constant 0 : index
    %2 = vector.load %arg3[%c0_4, %c0_5, %c0_6] : memref<1x8x1xf32, #tpu.memory_space<vmem>>, vector<1x8x1xf32>
    %cst = arith.constant 2.000000e+01 : f32
    %3 = vector.broadcast %cst : f32 to vector<8x128xf32>
    %4 = arith.mulf %3, %1 : vector<8x128xf32>
    %5 = vector.shape_cast %4 : vector<8x128xf32> to vector<1x8x128xf32>
    %6 = vector.shape_cast %5 : vector<1x8x128xf32> to vector<1x8x128xf32>
    %7 = vector.broadcast %6 : vector<1x8x128xf32> to vector<8x8x128xf32>
    %cst_7 = arith.constant dense<0.000000e+00> : vector<8x8x128xf32>
    %8 = tpu.matmul %7, %0, %cst_7 {dimension_numbers = #tpu.dot_dimension_numbers<[2], [1], [1], [2], [0, 0, 0, 1, 1, 2], [0], [0]>} : vector<8x8x128xf32>, vector<8x128x128xf32>, vector<8x8x128xf32> -> vector<8x8x128xf32>
    %9 = vector.broadcast %2 : vector<1x8x1xf32> to vector<8x8x128xf32>
    %10 = arith.addf %8, %9 : vector<8x8x128xf32>
    %cst_8 = arith.constant dense<0xFF800000> : vector<8x128xf32>
    %11 = vector.multi_reduction <maximumf>, %10, %cst_8 [1] : vector<8x8x128xf32> to vector<8x128xf32>
    %12 = vector.shape_cast %11 : vector<8x128xf32> to vector<8x1x128xf32>
    %13 = vector.broadcast %12 : vector<8x1x128xf32> to vector<8x8x128xf32>
    %14 = arith.subf %10, %13 : vector<8x8x128xf32>
    %15 = math.exp %14 : vector<8x8x128xf32>
    %cst_9 = arith.constant dense<0.000000e+00> : vector<8x128xf32>
    %16 = vector.multi_reduction <add>, %15, %cst_9 [1] : vector<8x8x128xf32> to vector<8x128xf32>
    %17 = vector.shape_cast %16 : vector<8x128xf32> to vector<8x1x128xf32>
    %18 = tpu.reciprocal %17 : vector<8x1x128xf32> -> vector<8x1x128xf32>
    %19 = vector.broadcast %18 : vector<8x1x128xf32> to vector<8x8x128xf32>
    %20 = arith.mulf %15, %19 : vector<8x8x128xf32>
    %cst_10 = arith.constant dense<0.000000e+00> : vector<8x8xf32>
    %21 = vector.multi_reduction <add>, %20, %cst_10 [2] : vector<8x8x128xf32> to vector<8x8xf32>
    %22 = vector.shape_cast %21 : vector<8x8xf32> to vector<8x8x1xf32>
    %cst_11 = arith.constant dense<0.000000e+00> : vector<8x8x128xf32>
    %23 = tpu.matmul %20, %0, %cst_11 {dimension_numbers = #tpu.dot_dimension_numbers<[2], [2], [1], [1], [0, 0, 0, 1, 1, 1], [0], [0]>} : vector<8x8x128xf32>, vector<8x128x128xf32>, vector<8x8x128xf32> -> vector<8x8x128xf32>
    %24 = vector.shape_cast %1 : vector<8x128xf32> to vector<1x8x128xf32>
    %25 = vector.broadcast %24 : vector<1x8x128xf32> to vector<8x8x128xf32>
    %26 = vector.broadcast %22 : vector<8x8x1xf32> to vector<8x8x128xf32>
    %27 = arith.mulf %25, %26 : vector<8x8x128xf32>
    %28 = arith.subf %23, %27 : vector<8x8x128xf32>
    %29 = arith.mulf %28, %28 : vector<8x8x128xf32>
    %cst_12 = arith.constant dense<0.000000e+00> : vector<8x8xf32>
    %30 = vector.multi_reduction <add>, %29, %cst_12 [2] : vector<8x8x128xf32> to vector<8x8xf32>
    %31 = vector.shape_cast %30 : vector<8x8xf32> to vector<8x8x1xf32>
    %cst_13 = arith.constant 1.000000e-24 : f32
    %32 = vector.broadcast %cst_13 : f32 to vector<8x8x1xf32>
    %33 = arith.maximumf %31, %32 : vector<8x8x1xf32>
    %34 = math.rsqrt %33 : vector<8x8x1xf32>
    %35 = arith.mulf %34, %34 : vector<8x8x1xf32>
    %36 = arith.mulf %31, %35 : vector<8x8x1xf32>
    %cst_14 = arith.constant dense<0.000000e+00> : vector<8x1xf32>
    %37 = vector.multi_reduction <add>, %36, %cst_14 [1] : vector<8x8x1xf32> to vector<8x1xf32>
    %38 = vector.shape_cast %37 : vector<8x1xf32> to vector<8x1x1xf32>
    %cst_15 = arith.constant 1.000000e-24 : f32
    %39 = vector.broadcast %cst_15 : f32 to vector<8x1x1xf32>
    %40 = arith.maximumf %38, %39 : vector<8x1x1xf32>
    %41 = math.rsqrt %40 : vector<8x1x1xf32>
    %42 = vector.broadcast %41 : vector<8x1x1xf32> to vector<8x8x1xf32>
    %43 = arith.mulf %34, %42 : vector<8x8x1xf32>
    %44 = vector.broadcast %43 : vector<8x8x1xf32> to vector<8x8x128xf32>
    %45 = arith.mulf %28, %44 : vector<8x8x128xf32>
    %c0_16 = arith.constant 0 : index
    %c0_17 = arith.constant 0 : index
    %c0_18 = arith.constant 0 : index
    %46 = vector.load %arg4[%c0_16, %c0_17, %c0_18] : memref<8x8x128xf32, #tpu.memory_space<vmem>>, vector<8x8x128xf32>
    tpu.vector_store %arg4[%c0_16, %c0_17, %c0_18], %45 {strides = array<i32>} : memref<8x8x128xf32, #tpu.memory_space<vmem>>, vector<8x8x128xf32>,
    return
  }
  func.func @transform_0(%arg0: i32) -> (i32, i32, i32) {
    %c0_i32 = arith.constant 0 : i32
    %c0_i32_0 = arith.constant 0 : i32
    %c0_i32_1 = arith.constant 0 : i32
    return %arg0, %c0_i32, %c0_i32_0 : i32, i32, i32
  }
  func.func @transform_1(%arg0: i32) -> (i32, i32) {
    %c0_i32 = arith.constant 0 : i32
    %c0_i32_0 = arith.constant 0 : i32
    %c0_i32_1 = arith.constant 0 : i32
    return %c0_i32, %c0_i32_0 : i32, i32
  }
  func.func @transform_2(%arg0: i32) -> (i32, i32, i32) {
    %c0_i32 = arith.constant 0 : i32
    %c0_i32_0 = arith.constant 0 : i32
    %c0_i32_1 = arith.constant 0 : i32
    %c0_i32_2 = arith.constant 0 : i32
    return %c0_i32, %c0_i32_0, %c0_i32_1 : i32, i32, i32
  }
  func.func @transform_3(%arg0: i32) -> (i32, i32, i32) {
    %c0_i32 = arith.constant 0 : i32
    %c0_i32_0 = arith.constant 0 : i32
    %c0_i32_1 = arith.constant 0 : i32
    return %arg0, %c0_i32, %c0_i32_0 : i32, i32, i32
  }
}

</mosaic_0001>

<llo_original>
// kernel: tpu_custom_call.1
$region0: #{tpu_custom_call.1}
  #allocation0 [shape = 'u32[]', space=smem, size = 0x4, offset = 0x4, fixed_abs, tag = 'smem constant byte address 0x4 - core index']
  #allocation1 [shape = 'u32[72,128]{1,0:T(1,128)}', space=vmem, size = 0x9000, scoped, tag = 'internal scratch']
  %s0 = inlined_call_operand.hbm [shape: f32[16,128,128], index: 0, kind: input, shape index: {}]
  %s1 = inlined_call_operand.vmem [shape: f32[8,128], index: 1, kind: input, shape index: {}]
  %s2 = inlined_call_operand.vmem [shape: f32[1,8,1], index: 2, kind: input, shape index: {}]
  %s3 = inlined_call_operand.hbm [shape: f32[16,8,128], index: 3, kind: output, shape index: {}]
  %s4 = sld [smem:[#allocation0]]
  $region49: #{tpu_custom_call.1} parent=0
    _
  %s6 = ssub.s32 1, %s4
  %s7 = scalar_select 0, %s6, %s4
  $region1: #{tpu_custom_call.1} parent=0
    #allocation2 [shape = 'u8[1048576]{0}', space=vmem, size = 0x100000, scoped, tag = 'input window, operand 0']
    #allocation3 [shape = 's32[2]{0}', space=sflag, size = 0x8, scoped, tag = 'scoped memory for tpu_custom_call.1']
    #allocation4 [shape = 's32[2]{0}', space=sflag, size = 0x8, scoped, tag = 'scoped memory for tpu_custom_call.1']
    #allocation5 [shape = 'u8[65536]{0}', space=vmem, size = 0x10000, scoped, tag = 'output window, operand 0']
    %8 = vsyncpa [#allocation3], 0
    %s9 = scalar_lea.sflag [#allocation3], 1
    %10 = vsyncpa %s9, 0
    %11 = vsyncpa [#allocation4], 0
    %s12 = scalar_lea.sflag [#allocation4], 1
    %13 = vsyncpa %s12, 0
    loop: start=0, step=1, limit=4
    $region2: #{tpu_custom_call.1} parent=1 // loop_pre_header
      _
    $region3: #{tpu_custom_call.1} parent=1 // loop_header
      %s15 = sphi 0, %s19
      %p16 = scmp.ge.s32.totalorder %s15, 4
      %s25 = sphi 0, %s27
      %s28 = sphi 0, %s25
      %s29 = sphi 0, %s28
      %s45 = sphi 0, %s29
      %s49 = sphi 0, %s49
      %s51 = sphi 0, %s49
      %s52 = sphi 0, %s51
      %s66 = sphi 0, %s52
      %s70 = sphi 0, %s70
      %s72 = sphi 0, %s70
      %s73 = sphi 0, %s72
      %s87 = sphi 0, %s73
      %s93 = sphi 0, %s95
      %s96 = sphi 0, %s93
      %s97 = sphi 0, %s96
      %s113 = sphi 0, %s97
    $region4: #{tpu_custom_call.1} parent=1 // loop_header_branch
      %18 = sbr.rel (%p16) target = $region8
    $region5: #{tpu_custom_call.1} parent=1 // loop_body
      %s20 = ssub.s32 %s15, 1
      %s21 = ssub.s32 %s15, 2
      %s22 = sadd.s32 %s15, 1
      %s23 = ssub.s32 %s15, %s22
      %p24 = scmp.eq.s32.totalorder %s23, 0
      %s26 = sadd.s32 %s25, 1
      %s27 = scalar_select %p24, %s25, %s26
      %p30 = pneg %p24
      %p31 = scmp.eq.s32.totalorder %s15, 1
      %p32 = por %p30, %p31
      %p33 = scmp.ne.s32.totalorder %s25, %s28
      %p34 = scmp.eq.s32.totalorder %s15, 0
      %p35 = por %p33, %p34
      %p36 = scmp.ne.s32.totalorder %s25, %s28
      %p37 = scmp.eq.s32.totalorder %s20, 1
      %p38 = por %p36, %p37
      %p39 = scmp.ne.s32.totalorder %s28, %s29
      %p40 = scmp.eq.s32.totalorder %s20, 0
      %p41 = por %p39, %p40
      %p42 = scmp.ne.s32.totalorder %s28, %s29
      %p43 = scmp.eq.s32.totalorder %s21, 1
      %p44 = por %p42, %p43
      %p46 = scmp.ne.s32.totalorder %s29, %s45
      %p47 = scmp.eq.s32.totalorder %s21, 0
      %p48 = por %p46, %p47
      %s50 = sadd.s32 %s49, 1
      %p53 = scmp.eq.s32.totalorder %s15, 1
      %p54 = scmp.ne.s32.totalorder %s49, %s51
      %p55 = scmp.eq.s32.totalorder %s15, 0
      %p56 = por %p54, %p55
      %p57 = scmp.ne.s32.totalorder %s49, %s51
      %p58 = scmp.eq.s32.totalorder %s20, 1
      %p59 = por %p57, %p58
      %p60 = scmp.ne.s32.totalorder %s51, %s52
      %p61 = scmp.eq.s32.totalorder %s20, 0
      %p62 = por %p60, %p61
      %p63 = scmp.ne.s32.totalorder %s51, %s52
      %p64 = scmp.eq.s32.totalorder %s21, 1
      %p65 = por %p63, %p64
      %p67 = scmp.ne.s32.totalorder %s52, %s66
      %p68 = scmp.eq.s32.totalorder %s21, 0
      %p69 = por %p67, %p68
      %s71 = sadd.s32 %s70, 1
      %p74 = scmp.eq.s32.totalorder %s15, 1
      %p75 = scmp.ne.s32.totalorder %s70, %s72
      %p76 = scmp.eq.s32.totalorder %s15, 0
      %p77 = por %p75, %p76
      %p78 = scmp.ne.s32.totalorder %s70, %s72
      %p79 = scmp.eq.s32.totalorder %s20, 1
      %p80 = por %p78, %p79
      %p81 = scmp.ne.s32.totalorder %s72, %s73
      %p82 = scmp.eq.s32.totalorder %s20, 0
      %p83 = por %p81, %p82
      %p84 = scmp.ne.s32.totalorder %s72, %s73
      %p85 = scmp.eq.s32.totalorder %s21, 1
      %p86 = por %p84, %p85
      %p88 = scmp.ne.s32.totalorder %s73, %s87
      %p89 = scmp.eq.s32.totalorder %s21, 0
      %p90 = por %p88, %p89
      %s91 = ssub.s32 %s15, %s22
      %p92 = scmp.eq.s32.totalorder %s91, 0
      %s94 = sadd.s32 %s93, 1
      %s95 = scalar_select %p92, %s93, %s94
      %p98 = pneg %p92
      %p99 = scmp.eq.s32.totalorder %s15, 1
      %p100 = por %p98, %p99
      %p101 = scmp.ne.s32.totalorder %s93, %s96
      %p102 = scmp.eq.s32.totalorder %s15, 0
      %p103 = por %p101, %p102
      %p104 = scmp.ne.s32.totalorder %s93, %s96
      %p105 = scmp.eq.s32.totalorder %s20, 1
      %p106 = por %p104, %p105
      %p107 = scmp.ne.s32.totalorder %s96, %s97
      %p108 = scmp.eq.s32.totalorder %s20, 0
      %p109 = por %p107, %p108
      %p110 = scmp.ne.s32.totalorder %s96, %s97
      %p111 = scmp.eq.s32.totalorder %s21, 1
      %p112 = por %p110, %p111
      %p114 = scmp.ne.s32.totalorder %s97, %s113
      %p115 = scmp.eq.s32.totalorder %s21, 0
      %p116 = por %p114, %p115
      %p117 = scmp.le.s32.totalorder 1, %s15
      %p118 = scmp.lt.s32.totalorder %s15, 3
      %p119 = pnand %p117, %p118
      %p120 = pneg %p119
      // Predicated region
      $region9: #{tpu_custom_call.1} parent=5 // pred_check
        _
      $region10: #{tpu_custom_call.1} parent=5 // pred_check_branch
        %122 = sbr.rel (%p119) target = $region12
      $region11: #{tpu_custom_call.1} parent=5 // pred_region
        %s123 = ssub.s32 %s15, 1
        // Predicated region
        $region13: #{tpu_custom_call.1} parent=11 // pred_check
          %p124 = pneg %p62
        $region14: #{tpu_custom_call.1} parent=11 // pred_check_branch
          %126 = sbr.rel (%p124) target = $region16
        $region15: #{tpu_custom_call.1} parent=11 // pred_region
          _
        $region16: #{tpu_custom_call.1} parent=11 // pred_fallthru
          _
        // Predicated region
        $region17: #{tpu_custom_call.1} parent=11 // pred_check
          %p127 = pneg %p83
        $region18: #{tpu_custom_call.1} parent=11 // pred_check_branch
          %129 = sbr.rel (%p127) target = $region20
        $region19: #{tpu_custom_call.1} parent=11 // pred_region
          _
        $region20: #{tpu_custom_call.1} parent=11 // pred_fallthru
          _
      $region12: #{tpu_custom_call.1} parent=5 // pred_fallthru
        _
      %p130 = scmp.lt.s32.totalorder %s15, 2
      // Predicated region
      $region21: #{tpu_custom_call.1} parent=5 // pred_check
        %p131 = pneg %p130
      $region22: #{tpu_custom_call.1} parent=5 // pred_check_branch
        %133 = sbr.rel (%p131) target = $region24
      $region23: #{tpu_custom_call.1} parent=5 // pred_region
        // Predicated region
        $region25: #{tpu_custom_call.1} parent=23 // pred_check
          %p134 = pneg %p35
        $region26: #{tpu_custom_call.1} parent=23 // pred_check_branch
          %136 = sbr.rel (%p134) target = $region28
        $region27: #{tpu_custom_call.1} parent=23 // pred_region
          %s137 = sand.u32 %s25, 1
          %s138 = scalar_lea.sflag [#allocation3], %s137
          %s139 = sand.u32 %s25, 1
          %s140 = smul.addr %s139, 1024
          %s141 = scalar_lea.vmem [#allocation2], %s140
          %s142 = smul.u32 8, %s15
          %144 = vsyncadd %s138, 0
          %s145 = smul.addr %s142, 16
          %s146 = smul.addr %s145, 8
          %s147 = scalar_lea.hbm %s0, %s146
          %s148 = sshll.u32 %s147, 4
          %s149 = int_to_ptr.hbm [resolvable:$true] %s148
          %s150 = sshll.u32 %s141, 4
          %s151 = int_to_ptr.vmem [resolvable:$true] %s150
          %156 = dma.hbm_to_vmem [thread:$0]  %s149, 16384, %s151, %s138, 128, 128, 8
        $region28: #{tpu_custom_call.1} parent=23 // pred_fallthru
          _
      $region24: #{tpu_custom_call.1} parent=5 // pred_fallthru
        _
      %p157 = scmp.le.s32.totalorder 1, %s15
      %p158 = scmp.lt.s32.totalorder %s15, 3
      %p159 = pnand %p157, %p158
      %p160 = pneg %p159
      // Predicated region
      $region29: #{tpu_custom_call.1} parent=5 // pred_check
        _
      $region30: #{tpu_custom_call.1} parent=5 // pred_check_branch
        %162 = sbr.rel (%p159) target = $region32
      $region31: #{tpu_custom_call.1} parent=5 // pred_region
        %s163 = ssub.s32 %s15, 1
        %s164 = sand.u32 %s28, 1
        %s165 = scalar_lea.sflag [#allocation3], %s164
        %s166 = sand.u32 %s28, 1
        %s167 = smul.addr %s166, 1024
        %s168 = scalar_lea.vmem [#allocation2], %s167
        // Predicated region
        $region33: #{tpu_custom_call.1} parent=31 // pred_check
          %p169 = pneg %p41
        $region34: #{tpu_custom_call.1} parent=31 // pred_check_branch
          %171 = sbr.rel (%p169) target = $region36
        $region35: #{tpu_custom_call.1} parent=31 // pred_region
          %173 = dma.done %s165, 16384
        $region36: #{tpu_custom_call.1} parent=31 // pred_fallthru
          _
        %s174 = sand.u32 %s28, 1
        %s175 = scalar_lea.sflag [#allocation3], %s174
        %s176 = sand.u32 %s28, 1
        %s177 = smul.addr %s176, 1024
        %s178 = scalar_lea.vmem [#allocation2], %s177
        %p179 = pneg %p41
        %p180 = pneg %p38
        %p181 = pneg %p62
        %p182 = pneg %p59
        %p183 = pneg %p83
        %p184 = pneg %p80
        %p185 = pneg %p109
        %p186 = pneg %p106
        %s187 = sand.u32 %s96, 1
        %s188 = scalar_lea.sflag [#allocation4], %s187
        %s189 = sand.u32 %s96, 1
        %s190 = smul.addr %s189, 64
        %s191 = scalar_lea.vmem [#allocation5], %s190
        %s192 = smul.u32 8, %s20
        %s193 = smul.u32 8, %s20
        %v194 = vld [vmem:[%s168] sm:$0xff]
        %v195 = vld [vmem:[%s168 + $0x8] sm:$0xff]
        %v196 = vld [vmem:[%s168 + $0x10] sm:$0xff]
        %v197 = vld [vmem:[%s168 + $0x18] sm:$0xff]
        %v198 = vld [vmem:[%s168 + $0x20] sm:$0xff]
        %v199 = vld [vmem:[%s168 + $0x28] sm:$0xff]
        %v200 = vld [vmem:[%s168 + $0x30] sm:$0xff]
        %v201 = vld [vmem:[%s168 + $0x38] sm:$0xff]
        %v202 = vld [vmem:[%s168 + $0x40] sm:$0xff]
        %v203 = vld [vmem:[%s168 + $0x48] sm:$0xff]
        %v204 = vld [vmem:[%s168 + $0x50] sm:$0xff]
        %v205 = vld [vmem:[%s168 + $0x58] sm:$0xff]
        %v206 = vld [vmem:[%s168 + $0x60] sm:$0xff]
        %v207 = vld [vmem:[%s168 + $0x68] sm:$0xff]
        %v208 = vld [vmem:[%s168 + $0x70] sm:$0xff]
        %v209 = vld [vmem:[%s168 + $0x78] sm:$0xff]
        %v210 = vld [vmem:[%s168 + $0x80] sm:$0xff]
        %v211 = vld [vmem:[%s168 + $0x88] sm:$0xff]
        %v212 = vld [vmem:[%s168 + $0x90] sm:$0xff]
        %v213 = vld [vmem:[%s168 + $0x98] sm:$0xff]
        %v214 = vld [vmem:[%s168 + $0xa0] sm:$0xff]
        %v215 = vld [vmem:[%s168 + $0xa8] sm:$0xff]
        %v216 = vld [vmem:[%s168 + $0xb0] sm:$0xff]
        %v217 = vld [vmem:[%s168 + $0xb8] sm:$0xff]
        %v218 = vld [vmem:[%s168 + $0xc0] sm:$0xff]
        %v219 = vld [vmem:[%s168 + $0xc8] sm:$0xff]
        %v220 = vld [vmem:[%s168 + $0xd0] sm:$0xff]
        %v221 = vld [vmem:[%s168 + $0xd8] sm:$0xff]
        %v222 = vld [vmem:[%s168 + $0xe0] sm:$0xff]
        %v223 = vld [vmem:[%s168 + $0xe8] sm:$0xff]
        %v224 = vld [vmem:[%s168 + $0xf0] sm:$0xff]
        %v225 = vld [vmem:[%s168 + $0xf8] sm:$0xff]
        %v226 = vld [vmem:[%s168 + $0x100] sm:$0xff]
        %v227 = vld [vmem:[%s168 + $0x108] sm:$0xff]
        %v228 = vld [vmem:[%s168 + $0x110] sm:$0xff]
        %v229 = vld [vmem:[%s168 + $0x118] sm:$0xff]
        %v230 = vld [vmem:[%s168 + $0x120] sm:$0xff]
        %v231 = vld [vmem:[%s168 + $0x128] sm:$0xff]
        %v232 = vld [vmem:[%s168 + $0x130] sm:$0xff]
        %v233 = vld [vmem:[%s168 + $0x138] sm:$0xff]
        %v234 = vld [vmem:[%s168 + $0x140] sm:$0xff]
        %v235 = vld [vmem:[%s168 + $0x148] sm:$0xff]
        %v236 = vld [vmem:[%s168 + $0x150] sm:$0xff]
        %v237 = vld [vmem:[%s168 + $0x158] sm:$0xff]
        %v238 = vld [vmem:[%s168 + $0x160] sm:$0xff]
        %v239 = vld [vmem:[%s168 + $0x168] sm:$0xff]
        %v240 = vld [vmem:[%s168 + $0x170] sm:$0xff]
        %v241 = vld [vmem:[%s168 + $0x178] sm:$0xff]
        %v242 = vld [vmem:[%s168 + $0x180] sm:$0xff]
        %v243 = vld [vmem:[%s168 + $0x188] sm:$0xff]
        %v244 = vld [vmem:[%s168 + $0x190] sm:$0xff]
        %v245 = vld [vmem:[%s168 + $0x198] sm:$0xff]
        %v246 = vld [vmem:[%s168 + $0x1a0] sm:$0xff]
        %v247 = vld [vmem:[%s168 + $0x1a8] sm:$0xff]
        %v248 = vld [vmem:[%s168 + $0x1b0] sm:$0xff]
        %v249 = vld [vmem:[%s168 + $0x1b8] sm:$0xff]
        %v250 = vld [vmem:[%s168 + $0x1c0] sm:$0xff]
        %v251 = vld [vmem:[%s168 + $0x1c8] sm:$0xff]
        %v252 = vld [vmem:[%s168 + $0x1d0] sm:$0xff]
        %v253 = vld [vmem:[%s168 + $0x1d8] sm:$0xff]
        %v254 = vld [vmem:[%s168 + $0x1e0] sm:$0xff]
        %v255 = vld [vmem:[%s168 + $0x1e8] sm:$0xff]
        %v256 = vld [vmem:[%s168 + $0x1f0] sm:$0xff]
        %v257 = vld [vmem:[%s168 + $0x1f8] sm:$0xff]
        %v258 = vld [vmem:[%s168 + $0x200] sm:$0xff]
        %v259 = vld [vmem:[%s168 + $0x208] sm:$0xff]
        %v260 = vld [vmem:[%s168 + $0x210] sm:$0xff]
        %v261 = vld [vmem:[%s168 + $0x218] sm:$0xff]
        %v262 = vld [vmem:[%s168 + $0x220] sm:$0xff]
        %v263 = vld [vmem:[%s168 + $0x228] sm:$0xff]
        %v264 = vld [vmem:[%s168 + $0x230] sm:$0xff]
        %v265 = vld [vmem:[%s168 + $0x238] sm:$0xff]
        %v266 = vld [vmem:[%s168 + $0x240] sm:$0xff]
        %v267 = vld [vmem:[%s168 + $0x248] sm:$0xff]
        %v268 = vld [vmem:[%s168 + $0x250] sm:$0xff]
        %v269 = vld [vmem:[%s168 + $0x258] sm:$0xff]
        %v270 = vld [vmem:[%s168 + $0x260] sm:$0xff]
        %v271 = vld [vmem:[%s168 + $0x268] sm:$0xff]
        %v272 = vld [vmem:[%s168 + $0x270] sm:$0xff]
        %v273 = vld [vmem:[%s168 + $0x278] sm:$0xff]
        %v274 = vld [vmem:[%s168 + $0x280] sm:$0xff]
        %v275 = vld [vmem:[%s168 + $0x288] sm:$0xff]
        %v276 = vld [vmem:[%s168 + $0x290] sm:$0xff]
        %v277 = vld [vmem:[%s168 + $0x298] sm:$0xff]
        %v278 = vld [vmem:[%s168 + $0x2a0] sm:$0xff]
        %v279 = vld [vmem:[%s168 + $0x2a8] sm:$0xff]
        %v280 = vld [vmem:[%s168 + $0x2b0] sm:$0xff]
        %v281 = vld [vmem:[%s168 + $0x2b8] sm:$0xff]
        %v282 = vld [vmem:[%s168 + $0x2c0] sm:$0xff]
        %v283 = vld [vmem:[%s168 + $0x2c8] sm:$0xff]
        %v284 = vld [vmem:[%s168 + $0x2d0] sm:$0xff]
        %v285 = vld [vmem:[%s168 + $0x2d8] sm:$0xff]
        %v286 = vld [vmem:[%s168 + $0x2e0] sm:$0xff]
        %v287 = vld [vmem:[%s168 + $0x2e8] sm:$0xff]
        %v288 = vld [vmem:[%s168 + $0x2f0] sm:$0xff]
        %v289 = vld [vmem:[%s168 + $0x2f8] sm:$0xff]
        %v290 = vld [vmem:[%s168 + $0x300] sm:$0xff]
        %v291 = vld [vmem:[%s168 + $0x308] sm:$0xff]
        %v292 = vld [vmem:[%s168 + $0x310] sm:$0xff]
        %v293 = vld [vmem:[%s168 + $0x318] sm:$0xff]
        %v294 = vld [vmem:[%s168 + $0x320] sm:$0xff]
        %v295 = vld [vmem:[%s168 + $0x328] sm:$0xff]
        %v296 = vld [vmem:[%s168 + $0x330] sm:$0xff]
        %v297 = vld [vmem:[%s168 + $0x338] sm:$0xff]
        %v298 = vld [vmem:[%s168 + $0x340] sm:$0xff]
        %v299 = vld [vmem:[%s168 + $0x348] sm:$0xff]
        %v300 = vld [vmem:[%s168 + $0x350] sm:$0xff]
        %v301 = vld [vmem:[%s168 + $0x358] sm:$0xff]
        %v302 = vld [vmem:[%s168 + $0x360] sm:$0xff]
        %v303 = vld [vmem:[%s168 + $0x368] sm:$0xff]
        %v304 = vld [vmem:[%s168 + $0x370] sm:$0xff]
        %v305 = vld [vmem:[%s168 + $0x378] sm:$0xff]
        %v306 = vld [vmem:[%s168 + $0x380] sm:$0xff]
        %v307 = vld [vmem:[%s168 + $0x388] sm:$0xff]
        %v308 = vld [vmem:[%s168 + $0x390] sm:$0xff]
        %v309 = vld [vmem:[%s168 + $0x398] sm:$0xff]
        %v310 = vld [vmem:[%s168 + $0x3a0] sm:$0xff]
        %v311 = vld [vmem:[%s168 + $0x3a8] sm:$0xff]
        %v312 = vld [vmem:[%s168 + $0x3b0] sm:$0xff]
        %v313 = vld [vmem:[%s168 + $0x3b8] sm:$0xff]
        %v314 = vld [vmem:[%s168 + $0x3c0] sm:$0xff]
        %v315 = vld [vmem:[%s168 + $0x3c8] sm:$0xff]
        %v316 = vld [vmem:[%s168 + $0x3d0] sm:$0xff]
        %v317 = vld [vmem:[%s168 + $0x3d8] sm:$0xff]
        %v318 = vld [vmem:[%s168 + $0x3e0] sm:$0xff]
        %v319 = vld [vmem:[%s168 + $0x3e8] sm:$0xff]
        %v320 = vld [vmem:[%s168 + $0x3f0] sm:$0xff]
        %v321 = vld [vmem:[%s168 + $0x3f8] sm:$0xff]
        %v322 = vld [vmem:[%s1] sm:$0xff]
        %v323 = vld [vmem:[%s2] sm:$0xff]
        %v324 = vmul.f32 %v322, 20.0
        %326 = vset.pattern.permute.xlu0 0
        %327 = vperm.xlu0 %326, %v323
        %v328 = vpop.permute.xlu0 %327
        %330 = vmatpush.msra.mxu0 %v209
        %331 = vmatpush.msra.mxu0 %v208
        %332 = vmatpush.msra.mxu0 %v207
        %333 = vmatpush.msra.mxu0 %v206
        %334 = vmatpush.msra.mxu0 %v205
        %335 = vmatpush.msra.mxu0 %v204
        %336 = vmatpush.msra.mxu0 %v203
        %337 = vmatpush.msra.mxu0 %v202
        %338 = vmatpush.msra.mxu0 %v201
        %339 = vmatpush.msra.mxu0 %v200
        %340 = vmatpush.msra.mxu0 %v199
        %341 = vmatpush.msra.mxu0 %v198
        %342 = vmatpush.msra.mxu0 %v197
        %343 = vmatpush.msra.mxu0 %v196
        %344 = vmatpush.msra.mxu0 %v195
        %345 = vmatpush.msra.mxu0 %v194
        %346 = vmatmul.f32.gmra.mxu0 %v324
        %v347 = vpop.f32.mrf.mxu0
        %v348 = vadd.f32 %v328, %v347
        %349 = vdwg.mxu0
        %350 = vmatpush.msra.mxu0 %v225
        %351 = vmatpush.msra.mxu0 %v224
        %352 = vmatpush.msra.mxu0 %v223
        %353 = vmatpush.msra.mxu0 %v222
        %354 = vmatpush.msra.mxu0 %v221
        %355 = vmatpush.msra.mxu0 %v220
        %356 = vmatpush.msra.mxu0 %v219
        %357 = vmatpush.msra.mxu0 %v218
        %358 = vmatpush.msra.mxu0 %v217
        %359 = vmatpush.msra.mxu0 %v216
        %360 = vmatpush.msra.mxu0 %v215
        %361 = vmatpush.msra.mxu0 %v214
        %362 = vmatpush.msra.mxu0 %v213
        %363 = vmatpush.msra.mxu0 %v212
        %364 = vmatpush.msra.mxu0 %v211
        %365 = vmatpush.msra.mxu0 %v210
        %366 = vmatmul.f32.gmra.mxu0 %v324
        %v367 = vpop.f32.mrf.mxu0
        %v368 = vadd.f32 %v328, %v367
        %369 = vdwg.mxu0
        %370 = vmatpush.msra.mxu0 %v241
        %371 = vmatpush.msra.mxu0 %v240
        %372 = vmatpush.msra.mxu0 %v239
        %373 = vmatpush.msra.mxu0 %v238
        %374 = vmatpush.msra.mxu0 %v237
        %375 = vmatpush.msra.mxu0 %v236
        %376 = vmatpush.msra.mxu0 %v235
        %377 = vmatpush.msra.mxu0 %v234
        %378 = vmatpush.msra.mxu0 %v233
        %379 = vmatpush.msra.mxu0 %v232
        %380 = vmatpush.msra.mxu0 %v231
        %381 = vmatpush.msra.mxu0 %v230
        %382 = vmatpush.msra.mxu0 %v229
        %383 = vmatpush.msra.mxu0 %v228
        %384 = vmatpush.msra.mxu0 %v227
        %385 = vmatpush.msra.mxu0 %v226
        %386 = vmatmul.f32.gmra.mxu0 %v324
        %v387 = vpop.f32.mrf.mxu0
        %v388 = vadd.f32 %v328, %v387
        %389 = vdwg.mxu0
        %390 = vmatpush.msra.mxu0 %v257
        %391 = vmatpush.msra.mxu0 %v256
        %392 = vmatpush.msra.mxu0 %v255
        %393 = vmatpush.msra.mxu0 %v254
        %394 = vmatpush.msra.mxu0 %v253
        %395 = vmatpush.msra.mxu0 %v252
        %396 = vmatpush.msra.mxu0 %v251
        %397 = vmatpush.msra.mxu0 %v250
        %398 = vmatpush.msra.mxu0 %v249
        %399 = vmatpush.msra.mxu0 %v248
        %400 = vmatpush.msra.mxu0 %v247
        %401 = vmatpush.msra.mxu0 %v246
        %402 = vmatpush.msra.mxu0 %v245
        %403 = vmatpush.msra.mxu0 %v244
        %404 = vmatpush.msra.mxu0 %v243
        %405 = vmatpush.msra.mxu0 %v242
        %406 = vmatmul.f32.gmra.mxu0 %v324
        %v407 = vpop.f32.mrf.mxu0
        %v408 = vadd.f32 %v328, %v407
        %409 = vdwg.mxu0
        %410 = vmatpush.msra.mxu0 %v273
        %411 = vmatpush.msra.mxu0 %v272
        %412 = vmatpush.msra.mxu0 %v271
        %413 = vmatpush.msra.mxu0 %v270
        %414 = vmatpush.msra.mxu0 %v269
        %415 = vmatpush.msra.mxu0 %v268
        %416 = vmatpush.msra.mxu0 %v267
        %417 = vmatpush.msra.mxu0 %v266
        %418 = vmatpush.msra.mxu0 %v265
        %419 = vmatpush.msra.mxu0 %v264
        %420 = vmatpush.msra.mxu0 %v263
        %421 = vmatpush.msra.mxu0 %v262
        %422 = vmatpush.msra.mxu0 %v261
        %423 = vmatpush.msra.mxu0 %v260
        %424 = vmatpush.msra.mxu0 %v259
        %425 = vmatpush.msra.mxu0 %v258
        %426 = vmatmul.f32.gmra.mxu0 %v324
        %v427 = vpop.f32.mrf.mxu0
        %v428 = vadd.f32 %v328, %v427
        %429 = vdwg.mxu0
        %430 = vmatpush.msra.mxu0 %v289
        %431 = vmatpush.msra.mxu0 %v288
        %432 = vmatpush.msra.mxu0 %v287
        %433 = vmatpush.msra.mxu0 %v286
        %434 = vmatpush.msra.mxu0 %v285
        %435 = vmatpush.msra.mxu0 %v284
        %436 = vmatpush.msra.mxu0 %v283
        %437 = vmatpush.msra.mxu0 %v282
        %438 = vmatpush.msra.mxu0 %v281
        %439 = vmatpush.msra.mxu0 %v280
        %440 = vmatpush.msra.mxu0 %v279
        %441 = vmatpush.msra.mxu0 %v278
        %442 = vmatpush.msra.mxu0 %v277
        %443 = vmatpush.msra.mxu0 %v276
        %444 = vmatpush.msra.mxu0 %v275
        %445 = vmatpush.msra.mxu0 %v274
        %446 = vmatmul.f32.gmra.mxu0 %v324
        %v447 = vpop.f32.mrf.mxu0
        %v448 = vadd.f32 %v328, %v447
        %449 = vdwg.mxu0
        %450 = vmatpush.msra.mxu0 %v305
        %451 = vmatpush.msra.mxu0 %v304
        %452 = vmatpush.msra.mxu0 %v303
        %453 = vmatpush.msra.mxu0 %v302
        %454 = vmatpush.msra.mxu0 %v301
        %455 = vmatpush.msra.mxu0 %v300
        %456 = vmatpush.msra.mxu0 %v299
        %457 = vmatpush.msra.mxu0 %v298
        %458 = vmatpush.msra.mxu0 %v297
        %459 = vmatpush.msra.mxu0 %v296
        %460 = vmatpush.msra.mxu0 %v295
        %461 = vmatpush.msra.mxu0 %v294
        %462 = vmatpush.msra.mxu0 %v293
        %463 = vmatpush.msra.mxu0 %v292
        %464 = vmatpush.msra.mxu0 %v291
        %465 = vmatpush.msra.mxu0 %v290
        %466 = vmatmul.f32.gmra.mxu0 %v324
        %v467 = vpop.f32.mrf.mxu0
        %v468 = vadd.f32 %v328, %v467
        %469 = vdwg.mxu0
        %470 = vmatpush.msra.mxu0 %v321
        %471 = vmatpush.msra.mxu0 %v320
        %472 = vmatpush.msra.mxu0 %v319
        %473 = vmatpush.msra.mxu0 %v318
        %474 = vmatpush.msra.mxu0 %v317
        %475 = vmatpush.msra.mxu0 %v316
        %476 = vmatpush.msra.mxu0 %v315
        %477 = vmatpush.msra.mxu0 %v314
        %478 = vmatpush.msra.mxu0 %v313
        %479 = vmatpush.msra.mxu0 %v312
        %480 = vmatpush.msra.mxu0 %v311
        %481 = vmatpush.msra.mxu0 %v310
        %482 = vmatpush.msra.mxu0 %v309
        %483 = vmatpush.msra.mxu0 %v308
        %484 = vmatpush.msra.mxu0 %v307
        %485 = vmatpush.msra.mxu0 %v306
        %486 = vmatmul.f32.gmra.mxu0 %v324
        %v487 = vpop.f32.mrf.mxu0
        %v488 = vadd.f32 %v328, %v487
        %489 = vdwg.mxu0
        %v490 = vrot.slane %v348, 4
        %v491 = vmax.f32 %v348, %v490
        %v492 = vrot.slane %v491, 2
        %v493 = vmax.f32 %v491, %v492
        %v494 = vrot.slane %v493, 1
        %v495 = vmax.f32 %v493, %v494
        %v496 = vrot.slane %v368, 4
        %v497 = vmax.f32 %v368, %v496
        %v498 = vrot.slane %v497, 2
        %v499 = vmax.f32 %v497, %v498
        %v500 = vrot.slane %v499, 1
        %v501 = vmax.f32 %v499, %v500
        %v502 = vrot.slane %v388, 4
        %v503 = vmax.f32 %v388, %v502
        %v504 = vrot.slane %v503, 2
        %v505 = vmax.f32 %v503, %v504
        %v506 = vrot.slane %v505, 1
        %v507 = vmax.f32 %v505, %v506
        %v508 = vrot.slane %v408, 4
        %v509 = vmax.f32 %v408, %v508
        %v510 = vrot.slane %v509, 2
        %v511 = vmax.f32 %v509, %v510
        %v512 = vrot.slane %v511, 1
        %v513 = vmax.f32 %v511, %v512
        %v514 = vrot.slane %v428, 4
        %v515 = vmax.f32 %v428, %v514
        %v516 = vrot.slane %v515, 2
        %v517 = vmax.f32 %v515, %v516
        %v518 = vrot.slane %v517, 1
        %v519 = vmax.f32 %v517, %v518
        %v520 = vrot.slane %v448, 4
        %v521 = vmax.f32 %v448, %v520
        %v522 = vrot.slane %v521, 2
        %v523 = vmax.f32 %v521, %v522
        %v524 = vrot.slane %v523, 1
        %v525 = vmax.f32 %v523, %v524
        %v526 = vrot.slane %v468, 4
        %v527 = vmax.f32 %v468, %v526
        %v528 = vrot.slane %v527, 2
        %v529 = vmax.f32 %v527, %v528
        %v530 = vrot.slane %v529, 1
        %v531 = vmax.f32 %v529, %v530
        %v532 = vrot.slane %v488, 4
        %v533 = vmax.f32 %v488, %v532
        %v534 = vrot.slane %v533, 2
        %v535 = vmax.f32 %v533, %v534
        %v536 = vrot.slane %v535, 1
        %v537 = vmax.f32 %v535, %v536
        %v538 = vsub.f32 %v348, %v495
        %v539 = vsub.f32 %v368, %v501
        %v540 = vsub.f32 %v388, %v507
        %v541 = vsub.f32 %v408, %v513
        %v542 = vsub.f32 %v428, %v519
        %v543 = vsub.f32 %v448, %v525
        %v544 = vsub.f32 %v468, %v531
        %v545 = vsub.f32 %v488, %v537
        %v546 = vmul.f32 %v538, 1.442695
        %v547 = vpow.pop %v546
        %v548 = vmul.f32 %v539, 1.442695
        %v549 = vpow.pop %v548
        %v550 = vmul.f32 %v540, 1.442695
        %v551 = vpow.pop %v550
        %v552 = vmul.f32 %v541, 1.442695
        %v553 = vpow.pop %v552
        %v554 = vmul.f32 %v542, 1.442695
        %v555 = vpow.pop %v554
        %v556 = vmul.f32 %v543, 1.442695
        %v557 = vpow.pop %v556
        %v558 = vmul.f32 %v544, 1.442695
        %v559 = vpow.pop %v558
        %v560 = vmul.f32 %v545, 1.442695
        %v561 = vpow.pop %v560
        %v562 = vrot.slane %v547, 4
        %v563 = vadd.f32 %v547, %v562
        %v564 = vrot.slane %v563, 2
        %v565 = vadd.f32 %v563, %v564
        %v566 = vrot.slane %v565, 1
        %v567 = vadd.f32 %v565, %v566
        %v568 = vrot.slane %v549, 4
        %v569 = vadd.f32 %v549, %v568
        %v570 = vrot.slane %v569, 2
        %v571 = vadd.f32 %v569, %v570
        %v572 = vrot.slane %v571, 1
        %v573 = vadd.f32 %v571, %v572
        %v574 = vrot.slane %v551, 4
        %v575 = vadd.f32 %v551, %v574
        %v576 = vrot.slane %v575, 2
        %v577 = vadd.f32 %v575, %v576
        %v578 = vrot.slane %v577, 1
        %v579 = vadd.f32 %v577, %v578
        %v580 = vrot.slane %v553, 4
        %v581 = vadd.f32 %v553, %v580
        %v582 = vrot.slane %v581, 2
        %v583 = vadd.f32 %v581, %v582
        %v584 = vrot.slane %v583, 1
        %v585 = vadd.f32 %v583, %v584
        %v586 = vrot.slane %v555, 4
        %v587 = vadd.f32 %v555, %v586
        %v588 = vrot.slane %v587, 2
        %v589 = vadd.f32 %v587, %v588
        %v590 = vrot.slane %v589, 1
        %v591 = vadd.f32 %v589, %v590
        %v592 = vrot.slane %v557, 4
        %v593 = vadd.f32 %v557, %v592
        %v594 = vrot.slane %v593, 2
        %v595 = vadd.f32 %v593, %v594
        %v596 = vrot.slane %v595, 1
        %v597 = vadd.f32 %v595, %v596
        %v598 = vrot.slane %v559, 4
        %v599 = vadd.f32 %v559, %v598
        %v600 = vrot.slane %v599, 2
        %v601 = vadd.f32 %v599, %v600
        %v602 = vrot.slane %v601, 1
        %v603 = vadd.f32 %v601, %v602
        %v604 = vrot.slane %v561, 4
        %v605 = vadd.f32 %v561, %v604
        %v606 = vrot.slane %v605, 2
        %v607 = vadd.f32 %v605, %v606
        %v608 = vrot.slane %v607, 1
        %v609 = vadd.f32 %v607, %v608
        %v610 = vrcp.pop %v567
        %v611 = vmul.f32 %v567, %v610
        %v612 = vsub.f32 1.0, %v611
        %v613 = vmul.f32 %v610, %v612
        %v614 = vadd.f32 %v610, %v613
        %vm615 = vweird.f32 %v567
        %vm616 = vweird.f32 %v610
        %vm617 = vmor %vm615, %vm616
        %v618 = vsel %vm617, %v610, %v614
        %v619 = vand.u32 2147483647, %v567
        %vm620 = vcmp.eq.f32.partialorder %v619, 8.507059e+37
        %v621 = vand.u32 %v567, 2147483648
        %v622 = vor.u32 1.1754944e-38, %v621
        %v623 = vsel %vm620, %v622, %v618
        %v624 = vrcp.pop %v573
        %v625 = vmul.f32 %v573, %v624
        %v626 = vsub.f32 1.0, %v625
        %v627 = vmul.f32 %v624, %v626
        %v628 = vadd.f32 %v624, %v627
        %vm629 = vweird.f32 %v573
        %vm630 = vweird.f32 %v624
        %vm631 = vmor %vm629, %vm630
        %v632 = vsel %vm631, %v624, %v628
        %v633 = vand.u32 2147483647, %v573
        %vm634 = vcmp.eq.f32.partialorder %v633, 8.507059e+37
        %v635 = vand.u32 %v573, 2147483648
        %v636 = vor.u32 1.1754944e-38, %v635
        %v637 = vsel %vm634, %v636, %v632
        %v638 = vrcp.pop %v579
        %v639 = vmul.f32 %v579, %v638
        %v640 = vsub.f32 1.0, %v639
        %v641 = vmul.f32 %v638, %v640
        %v642 = vadd.f32 %v638, %v641
        %vm643 = vweird.f32 %v579
        %vm644 = vweird.f32 %v638
        %vm645 = vmor %vm643, %vm644
        %v646 = vsel %vm645, %v638, %v642
        %v647 = vand.u32 2147483647, %v579
        %vm648 = vcmp.eq.f32.partialorder %v647, 8.507059e+37
        %v649 = vand.u32 %v579, 2147483648
        %v650 = vor.u32 1.1754944e-38, %v649
        %v651 = vsel %vm648, %v650, %v646
        %v652 = vrcp.pop %v585
        %v653 = vmul.f32 %v585, %v652
        %v654 = vsub.f32 1.0, %v653
        %v655 = vmul.f32 %v652, %v654
        %v656 = vadd.f32 %v652, %v655
        %vm657 = vweird.f32 %v585
        %vm658 = vweird.f32 %v652
        %vm659 = vmor %vm657, %vm658
        %v660 = vsel %vm659, %v652, %v656
        %v661 = vand.u32 2147483647, %v585
        %vm662 = vcmp.eq.f32.partialorder %v661, 8.507059e+37
        %v663 = vand.u32 %v585, 2147483648
        %v664 = vor.u32 1.1754944e-38, %v663
        %v665 = vsel %vm662, %v664, %v660
        %v666 = vrcp.pop %v591
        %v667 = vmul.f32 %v591, %v666
        %v668 = vsub.f32 1.0, %v667
        %v669 = vmul.f32 %v666, %v668
        %v670 = vadd.f32 %v666, %v669
        %vm671 = vweird.f32 %v591
        %vm672 = vweird.f32 %v666
        %vm673 = vmor %vm671, %vm672
        %v674 = vsel %vm673, %v666, %v670
        %v675 = vand.u32 2147483647, %v591
        %vm676 = vcmp.eq.f32.partialorder %v675, 8.507059e+37
        %v677 = vand.u32 %v591, 2147483648
        %v678 = vor.u32 1.1754944e-38, %v677
        %v679 = vsel %vm676, %v678, %v674
        %v680 = vrcp.pop %v597
        %v681 = vmul.f32 %v597, %v680
        %v682 = vsub.f32 1.0, %v681
        %v683 = vmul.f32 %v680, %v682
        %v684 = vadd.f32 %v680, %v683
        %vm685 = vweird.f32 %v597
        %vm686 = vweird.f32 %v680
        %vm687 = vmor %vm685, %vm686
        %v688 = vsel %vm687, %v680, %v684
        %v689 = vand.u32 2147483647, %v597
        %vm690 = vcmp.eq.f32.partialorder %v689, 8.507059e+37
        %v691 = vand.u32 %v597, 2147483648
        %v692 = vor.u32 1.1754944e-38, %v691
        %v693 = vsel %vm690, %v692, %v688
        %v694 = vrcp.pop %v603
        %v695 = vmul.f32 %v603, %v694
        %v696 = vsub.f32 1.0, %v695
        %v697 = vmul.f32 %v694, %v696
        %v698 = vadd.f32 %v694, %v697
        %vm699 = vweird.f32 %v603
        %vm700 = vweird.f32 %v694
        %vm701 = vmor %vm699, %vm700
        %v702 = vsel %vm701, %v694, %v698
        %v703 = vand.u32 2147483647, %v603
        %vm704 = vcmp.eq.f32.partialorder %v703, 8.507059e+37
        %v705 = vand.u32 %v603, 2147483648
        %v706 = vor.u32 1.1754944e-38, %v705
        %v707 = vsel %vm704, %v706, %v702
        %v708 = vrcp.pop %v609
        %v709 = vmul.f32 %v609, %v708
        %v710 = vsub.f32 1.0, %v709
        %v711 = vmul.f32 %v708, %v710
        %v712 = vadd.f32 %v708, %v711
        %vm713 = vweird.f32 %v609
        %vm714 = vweird.f32 %v708
        %vm715 = vmor %vm713, %vm714
        %v716 = vsel %vm715, %v708, %v712
        %v717 = vand.u32 2147483647, %v609
        %vm718 = vcmp.eq.f32.partialorder %v717, 8.507059e+37
        %v719 = vand.u32 %v609, 2147483648
        %v720 = vor.u32 1.1754944e-38, %v719
        %v721 = vsel %vm718, %v720, %v716
        %v722 = vmul.f32 %v547, %v623
        %v723 = vmul.f32 %v549, %v637
        %v724 = vmul.f32 %v551, %v651
        %v725 = vmul.f32 %v553, %v665
        %v726 = vmul.f32 %v555, %v679
        %v727 = vmul.f32 %v557, %v693
        %v728 = vmul.f32 %v559, %v707
        %v729 = vmul.f32 %v561, %v721
        %730 = vadd.xlane.f32.xlu0 %v722
        %v731 = vpop.xlane.xlu0 %730
        %732 = vadd.xlane.f32.xlu0 %v723
        %v733 = vpop.xlane.xlu0 %732
        %734 = vadd.xlane.f32.xlu0 %v724
        %v735 = vpop.xlane.xlu0 %734
        %736 = vadd.xlane.f32.xlu0 %v725
        %v737 = vpop.xlane.xlu0 %736
        %738 = vadd.xlane.f32.xlu0 %v726
        %v739 = vpop.xlane.xlu0 %738
        %740 = vadd.xlane.f32.xlu0 %v727
        %v741 = vpop.xlane.xlu0 %740
        %742 = vadd.xlane.f32.xlu0 %v728
        %v743 = vpop.xlane.xlu0 %742
        %744 = vadd.xlane.f32.xlu0 %v729
        %v745 = vpop.xlane.xlu0 %744
        %746 = vmatpush.xpose.msra.mxu0 %v209
        %747 = vmatpush.xpose.msra.mxu0 %v208
        %748 = vmatpush.xpose.msra.mxu0 %v207
        %749 = vmatpush.xpose.msra.mxu0 %v206
        %750 = vmatpush.xpose.msra.mxu0 %v205
        %751 = vmatpush.xpose.msra.mxu0 %v204
        %752 = vmatpush.xpose.msra.mxu0 %v203
        %753 = vmatpush.xpose.msra.mxu0 %v202
        %754 = vmatpush.xpose.msra.mxu0 %v201
        %755 = vmatpush.xpose.msra.mxu0 %v200
        %756 = vmatpush.xpose.msra.mxu0 %v199
        %757 = vmatpush.xpose.msra.mxu0 %v198
        %758 = vmatpush.xpose.msra.mxu0 %v197
        %759 = vmatpush.xpose.msra.mxu0 %v196
        %760 = vmatpush.xpose.msra.mxu0 %v195
        %761 = vmatpush.xpose.msra.mxu0 %v194
        %762 = vmatmul.f32.gmra.mxu0 %v722
        %v763 = vpop.f32.mrf.mxu0
        %v764 = vadd.f32 0.0, %v763
        %765 = vdwg.mxu0
        %766 = vmatpush.xpose.msra.mxu0 %v225
        %767 = vmatpush.xpose.msra.mxu0 %v224
        %768 = vmatpush.xpose.msra.mxu0 %v223
        %769 = vmatpush.xpose.msra.mxu0 %v222
        %770 = vmatpush.xpose.msra.mxu0 %v221
        %771 = vmatpush.xpose.msra.mxu0 %v220
        %772 = vmatpush.xpose.msra.mxu0 %v219
        %773 = vmatpush.xpose.msra.mxu0 %v218
        %774 = vmatpush.xpose.msra.mxu0 %v217
        %775 = vmatpush.xpose.msra.mxu0 %v216
        %776 = vmatpush.xpose.msra.mxu0 %v215
        %777 = vmatpush.xpose.msra.mxu0 %v214
        %778 = vmatpush.xpose.msra.mxu0 %v213
        %779 = vmatpush.xpose.msra.mxu0 %v212
        %780 = vmatpush.xpose.msra.mxu0 %v211
        %781 = vmatpush.xpose.msra.mxu0 %v210
        %782 = vmatmul.f32.gmra.mxu0 %v723
        %v783 = vpop.f32.mrf.mxu0
        %v784 = vadd.f32 0.0, %v783
        %785 = vdwg.mxu0
        %786 = vmatpush.xpose.msra.mxu0 %v241
        %787 = vmatpush.xpose.msra.mxu0 %v240
        %788 = vmatpush.xpose.msra.mxu0 %v239
        %789 = vmatpush.xpose.msra.mxu0 %v238
        %790 = vmatpush.xpose.msra.mxu0 %v237
        %791 = vmatpush.xpose.msra.mxu0 %v236
        %792 = vmatpush.xpose.msra.mxu0 %v235
        %793 = vmatpush.xpose.msra.mxu0 %v234
        %794 = vmatpush.xpose.msra.mxu0 %v233
        %795 = vmatpush.xpose.msra.mxu0 %v232
        %796 = vmatpush.xpose.msra.mxu0 %v231
        %797 = vmatpush.xpose.msra.mxu0 %v230
        %798 = vmatpush.xpose.msra.mxu0 %v229
        %799 = vmatpush.xpose.msra.mxu0 %v228
        %800 = vmatpush.xpose.msra.mxu0 %v227
        %801 = vmatpush.xpose.msra.mxu0 %v226
        %802 = vmatmul.f32.gmra.mxu0 %v724
        %v803 = vpop.f32.mrf.mxu0
        %v804 = vadd.f32 0.0, %v803
        %805 = vdwg.mxu0
        %806 = vmatpush.xpose.msra.mxu0 %v257
        %807 = vmatpush.xpose.msra.mxu0 %v256
        %808 = vmatpush.xpose.msra.mxu0 %v255
        %809 = vmatpush.xpose.msra.mxu0 %v254
        %810 = vmatpush.xpose.msra.mxu0 %v253
        %811 = vmatpush.xpose.msra.mxu0 %v252
        %812 = vmatpush.xpose.msra.mxu0 %v251
        %813 = vmatpush.xpose.msra.mxu0 %v250
        %814 = vmatpush.xpose.msra.mxu0 %v249
        %815 = vmatpush.xpose.msra.mxu0 %v248
        %816 = vmatpush.xpose.msra.mxu0 %v247
        %817 = vmatpush.xpose.msra.mxu0 %v246
        %818 = vmatpush.xpose.msra.mxu0 %v245
        %819 = vmatpush.xpose.msra.mxu0 %v244
        %820 = vmatpush.xpose.msra.mxu0 %v243
        %821 = vmatpush.xpose.msra.mxu0 %v242
        %822 = vmatmul.f32.gmra.mxu0 %v725
        %v823 = vpop.f32.mrf.mxu0
        %v824 = vadd.f32 0.0, %v823
        %825 = vdwg.mxu0
        %826 = vmatpush.xpose.msra.mxu0 %v273
        %827 = vmatpush.xpose.msra.mxu0 %v272
        %828 = vmatpush.xpose.msra.mxu0 %v271
        %829 = vmatpush.xpose.msra.mxu0 %v270
        %830 = vmatpush.xpose.msra.mxu0 %v269
        %831 = vmatpush.xpose.msra.mxu0 %v268
        %832 = vmatpush.xpose.msra.mxu0 %v267
        %833 = vmatpush.xpose.msra.mxu0 %v266
        %834 = vmatpush.xpose.msra.mxu0 %v265
        %835 = vmatpush.xpose.msra.mxu0 %v264
        %836 = vmatpush.xpose.msra.mxu0 %v263
        %837 = vmatpush.xpose.msra.mxu0 %v262
        %838 = vmatpush.xpose.msra.mxu0 %v261
        %839 = vmatpush.xpose.msra.mxu0 %v260
        %840 = vmatpush.xpose.msra.mxu0 %v259
        %841 = vmatpush.xpose.msra.mxu0 %v258
        %842 = vmatmul.f32.gmra.mxu0 %v726
        %v843 = vpop.f32.mrf.mxu0
        %v844 = vadd.f32 0.0, %v843
        %845 = vdwg.mxu0
        %846 = vmatpush.xpose.msra.mxu0 %v289
        %847 = vmatpush.xpose.msra.mxu0 %v288
        %848 = vmatpush.xpose.msra.mxu0 %v287
        %849 = vmatpush.xpose.msra.mxu0 %v286
        %850 = vmatpush.xpose.msra.mxu0 %v285
        %851 = vmatpush.xpose.msra.mxu0 %v284
        %852 = vmatpush.xpose.msra.mxu0 %v283
        %853 = vmatpush.xpose.msra.mxu0 %v282
        %854 = vmatpush.xpose.msra.mxu0 %v281
        %855 = vmatpush.xpose.msra.mxu0 %v280
        %856 = vmatpush.xpose.msra.mxu0 %v279
        %857 = vmatpush.xpose.msra.mxu0 %v278
        %858 = vmatpush.xpose.msra.mxu0 %v277
        %859 = vmatpush.xpose.msra.mxu0 %v276
        %860 = vmatpush.xpose.msra.mxu0 %v275
        %861 = vmatpush.xpose.msra.mxu0 %v274
        %862 = vmatmul.f32.gmra.mxu0 %v727
        %v863 = vpop.f32.mrf.mxu0
        %v864 = vadd.f32 0.0, %v863
        %865 = vdwg.mxu0
        %866 = vmatpush.xpose.msra.mxu0 %v305
        %867 = vmatpush.xpose.msra.mxu0 %v304
        %868 = vmatpush.xpose.msra.mxu0 %v303
        %869 = vmatpush.xpose.msra.mxu0 %v302
        %870 = vmatpush.xpose.msra.mxu0 %v301
        %871 = vmatpush.xpose.msra.mxu0 %v300
        %872 = vmatpush.xpose.msra.mxu0 %v299
        %873 = vmatpush.xpose.msra.mxu0 %v298
        %874 = vmatpush.xpose.msra.mxu0 %v297
        %875 = vmatpush.xpose.msra.mxu0 %v296
        %876 = vmatpush.xpose.msra.mxu0 %v295
        %877 = vmatpush.xpose.msra.mxu0 %v294
        %878 = vmatpush.xpose.msra.mxu0 %v293
        %879 = vmatpush.xpose.msra.mxu0 %v292
        %880 = vmatpush.xpose.msra.mxu0 %v291
        %881 = vmatpush.xpose.msra.mxu0 %v290
        %882 = vmatmul.f32.gmra.mxu0 %v728
        %v883 = vpop.f32.mrf.mxu0
        %v884 = vadd.f32 0.0, %v883
        %885 = vdwg.mxu0
        %886 = vmatpush.xpose.msra.mxu0 %v321
        %887 = vmatpush.xpose.msra.mxu0 %v320
        %888 = vmatpush.xpose.msra.mxu0 %v319
        %889 = vmatpush.xpose.msra.mxu0 %v318
        %890 = vmatpush.xpose.msra.mxu0 %v317
        %891 = vmatpush.xpose.msra.mxu0 %v316
        %892 = vmatpush.xpose.msra.mxu0 %v315
        %893 = vmatpush.xpose.msra.mxu0 %v314
        %894 = vmatpush.xpose.msra.mxu0 %v313
        %895 = vmatpush.xpose.msra.mxu0 %v312
        %896 = vmatpush.xpose.msra.mxu0 %v311
        %897 = vmatpush.xpose.msra.mxu0 %v310
        %898 = vmatpush.xpose.msra.mxu0 %v309
        %899 = vmatpush.xpose.msra.mxu0 %v308
        %900 = vmatpush.xpose.msra.mxu0 %v307
        %901 = vmatpush.xpose.msra.mxu0 %v306
        %902 = vmatmul.f32.gmra.mxu0 %v729
        %v903 = vpop.f32.mrf.mxu0
        %v904 = vadd.f32 0.0, %v903
        %905 = vdwg.mxu0
        %v906 = vmul.f32 %v322, %v731
        %v907 = vmul.f32 %v322, %v733
        %v908 = vmul.f32 %v322, %v735
        %v909 = vmul.f32 %v322, %v737
        %v910 = vmul.f32 %v322, %v739
        %v911 = vmul.f32 %v322, %v741
        %v912 = vmul.f32 %v322, %v743
        %v913 = vmul.f32 %v322, %v745
        %v914 = vsub.f32 %v764, %v906
        %v915 = vsub.f32 %v784, %v907
        %v916 = vsub.f32 %v804, %v908
        %v917 = vsub.f32 %v824, %v909
        %v918 = vsub.f32 %v844, %v910
        %v919 = vsub.f32 %v864, %v911
        %v920 = vsub.f32 %v884, %v912
        %v921 = vsub.f32 %v904, %v913
        %v922 = vmul.f32 %v914, %v914
        %v923 = vmul.f32 %v915, %v915
        %v924 = vmul.f32 %v916, %v916
        %v925 = vmul.f32 %v917, %v917
        %v926 = vmul.f32 %v918, %v918
        %v927 = vmul.f32 %v919, %v919
        %v928 = vmul.f32 %v920, %v920
        %v929 = vmul.f32 %v921, %v921
        %930 = vadd.xlane.f32.xlu0 %v922
        %v931 = vpop.xlane.xlu0 %930
        %932 = vadd.xlane.f32.xlu0 %v923
        %v933 = vpop.xlane.xlu0 %932
        %934 = vadd.xlane.f32.xlu0 %v924
        %v935 = vpop.xlane.xlu0 %934
        %936 = vadd.xlane.f32.xlu0 %v925
        %v937 = vpop.xlane.xlu0 %936
        %938 = vadd.xlane.f32.xlu0 %v926
        %v939 = vpop.xlane.xlu0 %938
        %940 = vadd.xlane.f32.xlu0 %v927
        %v941 = vpop.xlane.xlu0 %940
        %942 = vadd.xlane.f32.xlu0 %v928
        %v943 = vpop.xlane.xlu0 %942
        %944 = vadd.xlane.f32.xlu0 %v929
        %v945 = vpop.xlane.xlu0 %944
        %v946 = vmax.f32 %v931, 1e-24
        %v947 = vmax.f32 %v933, 1e-24
        %v948 = vmax.f32 %v935, 1e-24
        %v949 = vmax.f32 %v937, 1e-24
        %v950 = vmax.f32 %v939, 1e-24
        %v951 = vmax.f32 %v941, 1e-24
        %v952 = vmax.f32 %v943, 1e-24
        %v953 = vmax.f32 %v945, 1e-24
        %v954 = vrsqrt.pop %v946
        %v955 = vmul.f32 %v954, %v946
        %v956 = vmul.f32 %v955, %v954
        %v957 = vmul.f32 0.5, %v956
        %v958 = vsub.f32 1.5, %v957
        %v959 = vmul.f32 %v954, %v958
        %vm960 = vweird.f32 %v946
        %vm961 = vweird.f32 %v954
        %vm962 = vmor %vm960, %vm961
        %v963 = vsel %vm962, %v954, %v959
        %v964 = vrsqrt.pop %v947
        %v965 = vmul.f32 %v964, %v947
        %v966 = vmul.f32 %v965, %v964
        %v967 = vmul.f32 0.5, %v966
        %v968 = vsub.f32 1.5, %v967
        %v969 = vmul.f32 %v964, %v968
        %vm970 = vweird.f32 %v947
        %vm971 = vweird.f32 %v964
        %vm972 = vmor %vm970, %vm971
        %v973 = vsel %vm972, %v964, %v969
        %v974 = vrsqrt.pop %v948
        %v975 = vmul.f32 %v974, %v948
        %v976 = vmul.f32 %v975, %v974
        %v977 = vmul.f32 0.5, %v976
        %v978 = vsub.f32 1.5, %v977
        %v979 = vmul.f32 %v974, %v978
        %vm980 = vweird.f32 %v948
        %vm981 = vweird.f32 %v974
        %vm982 = vmor %vm980, %vm981
        %v983 = vsel %vm982, %v974, %v979
        %v984 = vrsqrt.pop %v949
        %v985 = vmul.f32 %v984, %v949
        %v986 = vmul.f32 %v985, %v984
        %v987 = vmul.f32 0.5, %v986
        %v988 = vsub.f32 1.5, %v987
        %v989 = vmul.f32 %v984, %v988
        %vm990 = vweird.f32 %v949
        %vm991 = vweird.f32 %v984
        %vm992 = vmor %vm990, %vm991
        %v993 = vsel %vm992, %v984, %v989
        %v994 = vrsqrt.pop %v950
        %v995 = vmul.f32 %v994, %v950
        %v996 = vmul.f32 %v995, %v994
        %v997 = vmul.f32 0.5, %v996
        %v998 = vsub.f32 1.5, %v997
        %v999 = vmul.f32 %v994, %v998
        %vm1000 = vweird.f32 %v950
        %vm1001 = vweird.f32 %v994
        %vm1002 = vmor %vm1000, %vm1001
        %v1003 = vsel %vm1002, %v994, %v999
        %v1004 = vrsqrt.pop %v951
        %v1005 = vmul.f32 %v1004, %v951
        %v1006 = vmul.f32 %v1005, %v1004
        %v1007 = vmul.f32 0.5, %v1006
        %v1008 = vsub.f32 1.5, %v1007
        %v1009 = vmul.f32 %v1004, %v1008
        %vm1010 = vweird.f32 %v951
        %vm1011 = vweird.f32 %v1004
        %vm1012 = vmor %vm1010, %vm1011
        %v1013 = vsel %vm1012, %v1004, %v1009
        %v1014 = vrsqrt.pop %v952
        %v1015 = vmul.f32 %v1014, %v952
        %v1016 = vmul.f32 %v1015, %v1014
        %v1017 = vmul.f32 0.5, %v1016
        %v1018 = vsub.f32 1.5, %v1017
        %v1019 = vmul.f32 %v1014, %v1018
        %vm1020 = vweird.f32 %v952
        %vm1021 = vweird.f32 %v1014
        %vm1022 = vmor %vm1020, %vm1021
        %v1023 = vsel %vm1022, %v1014, %v1019
        %v1024 = vrsqrt.pop %v953
        %v1025 = vmul.f32 %v1024, %v953
        %v1026 = vmul.f32 %v1025, %v1024
        %v1027 = vmul.f32 0.5, %v1026
        %v1028 = vsub.f32 1.5, %v1027
        %v1029 = vmul.f32 %v1024, %v1028
        %vm1030 = vweird.f32 %v953
        %vm1031 = vweird.f32 %v1024
        %vm1032 = vmor %vm1030, %vm1031
        %v1033 = vsel %vm1032, %v1024, %v1029
        %v1034 = vmul.f32 %v963, %v963
        %v1035 = vmul.f32 %v973, %v973
        %v1036 = vmul.f32 %v983, %v983
        %v1037 = vmul.f32 %v993, %v993
        %v1038 = vmul.f32 %v1003, %v1003
        %v1039 = vmul.f32 %v1013, %v1013
        %v1040 = vmul.f32 %v1023, %v1023
        %v1041 = vmul.f32 %v1033, %v1033
        %v1042 = vmul.f32 %v931, %v1034
        %v1043 = vmul.f32 %v933, %v1035
        %v1044 = vmul.f32 %v935, %v1036
        %v1045 = vmul.f32 %v937, %v1037
        %v1046 = vmul.f32 %v939, %v1038
        %v1047 = vmul.f32 %v941, %v1039
        %v1048 = vmul.f32 %v943, %v1040
        %v1049 = vmul.f32 %v945, %v1041
        %v1050 = vrot.slane %v1042, 4
        %v1051 = vadd.f32 %v1042, %v1050
        %v1052 = vrot.slane %v1051, 2
        %v1053 = vadd.f32 %v1051, %v1052
        %v1054 = vrot.slane %v1053, 1
        %v1055 = vadd.f32 %v1053, %v1054
        %v1056 = vrot.slane %v1043, 4
        %v1057 = vadd.f32 %v1043, %v1056
        %v1058 = vrot.slane %v1057, 2
        %v1059 = vadd.f32 %v1057, %v1058
        %v1060 = vrot.slane %v1059, 1
        %v1061 = vadd.f32 %v1059, %v1060
        %v1062 = vrot.slane %v1044, 4
        %v1063 = vadd.f32 %v1044, %v1062
        %v1064 = vrot.slane %v1063, 2
        %v1065 = vadd.f32 %v1063, %v1064
        %v1066 = vrot.slane %v1065, 1
        %v1067 = vadd.f32 %v1065, %v1066
        %v1068 = vrot.slane %v1045, 4
        %v1069 = vadd.f32 %v1045, %v1068
        %v1070 = vrot.slane %v1069, 2
        %v1071 = vadd.f32 %v1069, %v1070
        %v1072 = vrot.slane %v1071, 1
        %v1073 = vadd.f32 %v1071, %v1072
        %v1074 = vrot.slane %v1046, 4
        %v1075 = vadd.f32 %v1046, %v1074
        %v1076 = vrot.slane %v1075, 2
        %v1077 = vadd.f32 %v1075, %v1076
        %v1078 = vrot.slane %v1077, 1
        %v1079 = vadd.f32 %v1077, %v1078
        %v1080 = vrot.slane %v1047, 4
        %v1081 = vadd.f32 %v1047, %v1080
        %v1082 = vrot.slane %v1081, 2
        %v1083 = vadd.f32 %v1081, %v1082
        %v1084 = vrot.slane %v1083, 1
        %v1085 = vadd.f32 %v1083, %v1084
        %v1086 = vrot.slane %v1048, 4
        %v1087 = vadd.f32 %v1048, %v1086
        %v1088 = vrot.slane %v1087, 2
        %v1089 = vadd.f32 %v1087, %v1088
        %v1090 = vrot.slane %v1089, 1
        %v1091 = vadd.f32 %v1089, %v1090
        %v1092 = vrot.slane %v1049, 4
        %v1093 = vadd.f32 %v1049, %v1092
        %v1094 = vrot.slane %v1093, 2
        %v1095 = vadd.f32 %v1093, %v1094
        %v1096 = vrot.slane %v1095, 1
        %v1097 = vadd.f32 %v1095, %v1096
        %v1098 = vmax.f32 %v1055, 1e-24
        %v1099 = vmax.f32 %v1061, 1e-24
        %v1100 = vmax.f32 %v1067, 1e-24
        %v1101 = vmax.f32 %v1073, 1e-24
        %v1102 = vmax.f32 %v1079, 1e-24
        %v1103 = vmax.f32 %v1085, 1e-24
        %v1104 = vmax.f32 %v1091, 1e-24
        %v1105 = vmax.f32 %v1097, 1e-24
        %v1106 = vrsqrt.pop %v1098
        %v1107 = vmul.f32 %v1106, %v1098
        %v1108 = vmul.f32 %v1107, %v1106
        %v1109 = vmul.f32 0.5, %v1108
        %v1110 = vsub.f32 1.5, %v1109
        %v1111 = vmul.f32 %v1106, %v1110
        %vm1112 = vweird.f32 %v1098
        %vm1113 = vweird.f32 %v1106
        %vm1114 = vmor %vm1112, %vm1113
        %v1115 = vsel %vm1114, %v1106, %v1111
        %v1116 = vrsqrt.pop %v1099
        %v1117 = vmul.f32 %v1116, %v1099
        %v1118 = vmul.f32 %v1117, %v1116
        %v1119 = vmul.f32 0.5, %v1118
        %v1120 = vsub.f32 1.5, %v1119
        %v1121 = vmul.f32 %v1116, %v1120
        %vm1122 = vweird.f32 %v1099
        %vm1123 = vweird.f32 %v1116
        %vm1124 = vmor %vm1122, %vm1123
        %v1125 = vsel %vm1124, %v1116, %v1121
        %v1126 = vrsqrt.pop %v1100
        %v1127 = vmul.f32 %v1126, %v1100
        %v1128 = vmul.f32 %v1127, %v1126
        %v1129 = vmul.f32 0.5, %v1128
        %v1130 = vsub.f32 1.5, %v1129
        %v1131 = vmul.f32 %v1126, %v1130
        %vm1132 = vweird.f32 %v1100
        %vm1133 = vweird.f32 %v1126
        %vm1134 = vmor %vm1132, %vm1133
        %v1135 = vsel %vm1134, %v1126, %v1131
        %v1136 = vrsqrt.pop %v1101
        %v1137 = vmul.f32 %v1136, %v1101
        %v1138 = vmul.f32 %v1137, %v1136
        %v1139 = vmul.f32 0.5, %v1138
        %v1140 = vsub.f32 1.5, %v1139
        %v1141 = vmul.f32 %v1136, %v1140
        %vm1142 = vweird.f32 %v1101
        %vm1143 = vweird.f32 %v1136
        %vm1144 = vmor %vm1142, %vm1143
        %v1145 = vsel %vm1144, %v1136, %v1141
        %v1146 = vrsqrt.pop %v1102
        %v1147 = vmul.f32 %v1146, %v1102
        %v1148 = vmul.f32 %v1147, %v1146
        %v1149 = vmul.f32 0.5, %v1148
        %v1150 = vsub.f32 1.5, %v1149
        %v1151 = vmul.f32 %v1146, %v1150
        %vm1152 = vweird.f32 %v1102
        %vm1153 = vweird.f32 %v1146
        %vm1154 = vmor %vm1152, %vm1153
        %v1155 = vsel %vm1154, %v1146, %v1151
        %v1156 = vrsqrt.pop %v1103
        %v1157 = vmul.f32 %v1156, %v1103
        %v1158 = vmul.f32 %v1157, %v1156
        %v1159 = vmul.f32 0.5, %v1158
        %v1160 = vsub.f32 1.5, %v1159
        %v1161 = vmul.f32 %v1156, %v1160
        %vm1162 = vweird.f32 %v1103
        %vm1163 = vweird.f32 %v1156
        %vm1164 = vmor %vm1162, %vm1163
        %v1165 = vsel %vm1164, %v1156, %v1161
        %v1166 = vrsqrt.pop %v1104
        %v1167 = vmul.f32 %v1166, %v1104
        %v1168 = vmul.f32 %v1167, %v1166
        %v1169 = vmul.f32 0.5, %v1168
        %v1170 = vsub.f32 1.5, %v1169
        %v1171 = vmul.f32 %v1166, %v1170
        %vm1172 = vweird.f32 %v1104
        %vm1173 = vweird.f32 %v1166
        %vm1174 = vmor %vm1172, %vm1173
        %v1175 = vsel %vm1174, %v1166, %v1171
        %v1176 = vrsqrt.pop %v1105
        %v1177 = vmul.f32 %v1176, %v1105
        %v1178 = vmul.f32 %v1177, %v1176
        %v1179 = vmul.f32 0.5, %v1178
        %v1180 = vsub.f32 1.5, %v1179
        %v1181 = vmul.f32 %v1176, %v1180
        %vm1182 = vweird.f32 %v1105
        %vm1183 = vweird.f32 %v1176
        %vm1184 = vmor %vm1182, %vm1183
        %v1185 = vsel %vm1184, %v1176, %v1181
        %v1186 = vmul.f32 %v963, %v1115
        %v1187 = vmul.f32 %v973, %v1125
        %v1188 = vmul.f32 %v983, %v1135
        %v1189 = vmul.f32 %v993, %v1145
        %v1190 = vmul.f32 %v1003, %v1155
        %v1191 = vmul.f32 %v1013, %v1165
        %v1192 = vmul.f32 %v1023, %v1175
        %v1193 = vmul.f32 %v1033, %v1185
        %v1194 = vmul.f32 %v914, %v1186
        %v1195 = vmul.f32 %v915, %v1187
        %v1196 = vmul.f32 %v916, %v1188
        %v1197 = vmul.f32 %v917, %v1189
        %v1198 = vmul.f32 %v918, %v1190
        %v1199 = vmul.f32 %v919, %v1191
        %v1200 = vmul.f32 %v920, %v1192
        %v1201 = vmul.f32 %v921, %v1193
        %1202 = vst [vmem:[%s191] sm:$0xff] %v1194
        %1203 = vst [vmem:[%s191 + $0x8] sm:$0xff] %v1195
        %1204 = vst [vmem:[%s191 + $0x10] sm:$0xff] %v1196
        %1205 = vst [vmem:[%s191 + $0x18] sm:$0xff] %v1197
        %1206 = vst [vmem:[%s191 + $0x20] sm:$0xff] %v1198
        %1207 = vst [vmem:[%s191 + $0x28] sm:$0xff] %v1199
        %1208 = vst [vmem:[%s191 + $0x30] sm:$0xff] %v1200
        %1209 = vst [vmem:[%s191 + $0x38] sm:$0xff] %v1201
        %s1210 = sand.u32 %s96, 1
        %s1211 = scalar_lea.sflag [#allocation4], %s1210
        %s1212 = sand.u32 %s96, 1
        %s1213 = smul.addr %s1212, 64
        %s1214 = scalar_lea.vmem [#allocation5], %s1213
        // Predicated region
        $region37: #{tpu_custom_call.1} parent=31 // pred_check
          %p1215 = pneg %p106
        $region38: #{tpu_custom_call.1} parent=31 // pred_check_branch
          %1217 = sbr.rel (%p1215) target = $region40
        $region39: #{tpu_custom_call.1} parent=31 // pred_region
          %s1218 = smul.u32 8, %s20
          %1220 = vsyncadd %s1211, 0
          %s1221 = smul.addr %s1218, 8
          %s1222 = scalar_lea.hbm %s3, %s1221
          %s1223 = sshll.u32 %s1214, 4
          %s1224 = int_to_ptr.vmem [resolvable:$true] %s1223
          %s1225 = sshll.u32 %s1222, 4
          %s1226 = int_to_ptr.hbm [resolvable:$true] %s1225
          %1231 = dma.vmem_to_hbm [thread:$0]  %s1224, 1024, %s1226, %s1211, 128, 128, 8
        $region40: #{tpu_custom_call.1} parent=31 // pred_fallthru
          _
      $region32: #{tpu_custom_call.1} parent=5 // pred_fallthru
        _
      %p1232 = scmp.le.s32.totalorder 2, %s15
      // Predicated region
      $region41: #{tpu_custom_call.1} parent=5 // pred_check
        %p1233 = pneg %p1232
      $region42: #{tpu_custom_call.1} parent=5 // pred_check_branch
        %1235 = sbr.rel (%p1233) target = $region44
      $region43: #{tpu_custom_call.1} parent=5 // pred_region
        %s1236 = ssub.s32 %s15, 2
        // Predicated region
        $region45: #{tpu_custom_call.1} parent=43 // pred_check
          %p1237 = pneg %p112
        $region46: #{tpu_custom_call.1} parent=43 // pred_check_branch
          %1239 = sbr.rel (%p1237) target = $region48
        $region47: #{tpu_custom_call.1} parent=43 // pred_region
          %s1240 = sand.u32 %s97, 1
          %s1241 = scalar_lea.sflag [#allocation4], %s1240
          %s1242 = sand.u32 %s97, 1
          %s1243 = smul.addr %s1242, 64
          %s1244 = scalar_lea.vmem [#allocation5], %s1243
          %1246 = dma.done %s1241, 1024
        $region48: #{tpu_custom_call.1} parent=43 // pred_fallthru
          _
      $region44: #{tpu_custom_call.1} parent=5 // pred_fallthru
        _
    $region6: #{tpu_custom_call.1} parent=1 // loop_footer
      %s19 = sadd.s32 1, %s15
    $region7: #{tpu_custom_call.1} parent=1 // loop_footer_branch
      %14 = sbr.rel target = $region3
    $region8: #{tpu_custom_call.1} parent=1 // loop_exit
      _
    %1247 = vsyncpa [#allocation3], 1
    %s1248 = scalar_lea.sflag [#allocation3], 1
    %1249 = vsyncpa %s1248, 1
    %1250 = vsyncpa [#allocation4], 1
    %s1251 = scalar_lea.sflag [#allocation4], 1
    %1252 = vsyncpa %s1251, 1

</llo_original>
